<compile_context>
chip_gen: v7x
topology: tpu7x:2x2x1
jax: 0.10.0
libtpu: 0.0.40
codegen_flags: <defaults>
</compile_context>

<pallas_src>
import functools
import math

import jax
import jax.numpy as jnp
from jax.experimental import pallas as pl
from jax.experimental.pallas import tpu as pltpu

_LANE = 128
_SUBLANE = 8


def _row_multiple(dtype):
    """Sublane multiple required for the second-to-last block dim for `dtype`."""
    itemsize = jnp.dtype(dtype).itemsize
    return _SUBLANE * max(1, 4 // max(1, itemsize))   # 8 f32 / 16 bf16 / 32 int8


def _wbce_kernel(pw_ref, x_ref, t_ref, out_ref, *,
                 block_rows, cols, blocks_per_chunk, rows):
    """Grid = (parallel chunks, sequential row-blocks per chunk).

    Each step processes a (block_rows, cols) slab in native dtype, upcasts to
    f32 in VMEM, and accumulates per-(sublane, lane) partial sums directly into
    the resident (8, cols) output tile.
    """
    p = pl.program_id(0)   # parallel chunk (dual-TC friendly on v7x)
    j = pl.program_id(1)   # sequential reduction axis within the chunk

    @pl.when(j == 0)
    def _():
        out_ref[...] = jnp.zeros_like(out_ref)

    x = x_ref[...].astype(jnp.float32)
    t = t_ref[...].astype(jnp.float32)
    x = jnp.clip(x, 1e-07, 1.0 - 1e-07)

    pw = pw_ref[0]                      # scalar pos_weight from SMEM
    logx = jnp.log(x)                   # EUP
    log1mx = jnp.log(1.0 - x)           # EUP (matches torch.log(1 - x) exactly)
    # -pw*t*log(x) - (1-t)*log(1-x)  ==  (t-1)*log(1-x) - pw*(t*log(x))
    loss = (t - 1.0) * log1mx - pw * (t * logx)

    # Unclamped logical block index: the index_map clamps the DMA source to the
    # last valid block, but masking here uses the true index so duplicated /
    # over-covered blocks contribute exactly zero.
    block_idx = p * blocks_per_chunk + j
    row0 = block_idx * block_rows
    remaining_rows = rows - row0
    # TODO(synk): int32 row index math limits rows to < 2**31.

    def _accumulate(vals):
        out_ref[...] += jnp.sum(
            vals.reshape(block_rows // _SUBLANE, _SUBLANE, cols), axis=0)

    # Hot path: block entirely inside the array -> no masking, pure VPU/EUP.
    @pl.when(remaining_rows >= block_rows)
    def _():
        _accumulate(loss)

    # Cold path: tail or duplicated block -> select (NOT multiply: over-covered
    # rows hold unspecified data, possibly NaN/Inf) only rows that exist.
    @pl.when(remaining_rows < block_rows)
    def _():
        r = jax.lax.broadcasted_iota(jnp.int32, (block_rows, cols), 0)
        _accumulate(jnp.where(row0 + r < rows, loss, 0.0))


def _default_parallel_chunks():
    # v7x has 2 TensorCores per chip; v5e/v6e have 1 (an extra chunk there only
    # splits the sequential pipeline and adds a second writeback).
    try:
        kind = jax.devices()[0].device_kind.lower()
    except Exception:
        return 1
    return 2 if "v7" in kind else 1


def weighted_bce_loss(sigmoid_x, targets, pos_weight=1.0, *,
                      block_rows=None, parallel_chunks=None):
    """Pallas implementation of WeightedBCELoss.forward
    (weight=None, scalar pos_weight, size_average=True, reduce=True)."""
    if sigmoid_x.shape != targets.shape:
        raise ValueError(
            "Target size ({}) must be the same as input size ({})".format(
                targets.shape, sigmoid_x.shape))

    total = int(math.prod(sigmoid_x.shape))
    if total == 0:
        return jnp.float32(jnp.nan)   # torch: mean of an empty tensor is nan

    # Zero-copy 2D view: collapse leading dims, keep the trailing dim on lanes.
    # (No jnp.pad / relayout: the grid over-covers rows and masks in-kernel.)
    cols = int(sigmoid_x.shape[-1]) if sigmoid_x.ndim >= 2 else total
    rows = total // cols
    x2 = sigmoid_x.reshape(rows, cols)
    t2 = targets.reshape(rows, cols)
    # TODO(synk): a single row wider than VMEM (huge trailing dim) would need an
    # additional column-tiled grid axis; not handled here.

    req = max(_row_multiple(x2.dtype), _row_multiple(t2.dtype))
    rows_ceil = -(-rows // req) * req

    if block_rows is None:
        # Target ~8 MiB of streamed input (both operands) per grid step; the
        # double-buffered footprint stays ~16 MiB, inside the 32 MiB limit on
        # all generations (v7x has only 64 MiB physical VMEM per TC).
        cols_padded = -(-cols // _LANE) * _LANE
        bytes_per_row = cols_padded * (
            jnp.dtype(x2.dtype).itemsize + jnp.dtype(t2.dtype).itemsize)
        block_rows = max(1, (8 * 1024 * 1024) // max(1, bytes_per_row))
    block_rows = min(int(block_rows), rows_ceil)
    block_rows = max(req, (block_rows // req) * req)

    num_blocks = -(-rows // block_rows)
    if parallel_chunks is None:
        parallel_chunks = _default_parallel_chunks()
    nchunks = max(1, min(int(parallel_chunks), num_blocks))
    blocks_per_chunk = -(-num_blocks // nchunks)
    last_block = num_blocks - 1

    pw = jnp.asarray(pos_weight, dtype=jnp.float32).reshape((1,))

    kernel = functools.partial(
        _wbce_kernel,
        block_rows=block_rows,
        cols=cols,
        blocks_per_chunk=blocks_per_chunk,
        rows=rows,
    )

    def _xt_index_map(p, j):
        # Clamp the DMA source to the last valid row-block; the kernel uses the
        # unclamped logical index so duplicated blocks mask to zero.
        return (jnp.minimum(p * blocks_per_chunk + j, last_block), 0)

    partials = pl.pallas_call(
        kernel,
        out_shape=jax.ShapeDtypeStruct((nchunks * _SUBLANE, cols), jnp.float32),
        grid_spec=pltpu.PrefetchScalarGridSpec(
            num_scalar_prefetch=0,
            grid=(nchunks, blocks_per_chunk),
            in_specs=[
                pl.BlockSpec(memory_space=pltpu.SMEM),            # pos_weight
                pl.BlockSpec((block_rows, cols), _xt_index_map),  # x, native dtype
                pl.BlockSpec((block_rows, cols), _xt_index_map),  # t, native dtype
            ],
            out_specs=pl.BlockSpec((_SUBLANE, cols), lambda p, j: (p, 0)),
        ),
        compiler_params=pltpu.CompilerParams(
            dimension_semantics=("parallel", "arbitrary"),
            vmem_limit_bytes=32 * 1024 * 1024,
        ),
    )(pw, x2, t2)

    # size_average=True, reduce=True -> mean over the true element count.
    return jnp.sum(partials) / jnp.float32(total)


def weighted_bce_loss_ref(sigmoid_x, targets, pos_weight=1.0):
    x = jnp.clip(sigmoid_x.astype(jnp.float32), 1e-07, 1.0 - 1e-07)
    t = targets.astype(jnp.float32)
    loss = -pos_weight * t * jnp.log(x) - (1.0 - t) * jnp.log(1.0 - x)
    return jnp.mean(loss)


if __name__ == "__main__":
    key = jax.random.PRNGKey(0)

    # Case 1: small [N, C] matching the PyTorch convention (single block,
    # lane extent = full trailing dim).
    kx, kt, key = jax.random.split(key, 3)
    N, C = 16, 32
    sigmoid_x = jax.nn.sigmoid(jax.random.normal(kx, (N, C), dtype=jnp.float32))
    targets = (jax.random.uniform(kt, (N, C)) > 0.5).astype(jnp.float32)
    loss = jax.block_until_ready(weighted_bce_loss(sigmoid_x, targets, 1.0))
    ref = weighted_bce_loss_ref(sigmoid_x, targets, 1.0)
    assert jnp.allclose(loss, ref, rtol=1e-5, atol=1e-6), (loss, ref)

    # Case 2: 4-D input with lane-aligned trailing dim (zero-copy collapse),
    # bf16 predictions (native-dtype streaming, 16-row sublane multiple), small
    # blocks + 2 parallel chunks to exercise multi-block / dual-chunk / partial
    # tail-row masking.
    kx, kt, key = jax.random.split(key, 3)
    shape2 = (2, 5, 3, 128)   # rows=30, cols=128
    sx2 = jax.nn.sigmoid(jax.random.normal(kx, shape2)).astype(jnp.bfloat16)
    tg2 = (jax.random.uniform(kt, shape2) > 0.5).astype(jnp.float32)
    loss2 = jax.block_until_ready(
        weighted_bce_loss(sx2, tg2, 2.5, block_rows=16, parallel_chunks=2))
    ref2 = weighted_bce_loss_ref(sx2, tg2, 2.5)
    assert jnp.allclose(loss2, ref2, rtol=2e-5, atol=1e-6), (loss2, ref2)

    # Case 3: awkward class count (C=17, not lane-aligned): block lane extent is
    # the full trailing dim, still no pad/relayout; many blocks + masked tail.
    kx, kt, key = jax.random.split(key, 3)
    N3, C3 = 300, 17
    sx3 = jax.nn.sigmoid(jax.random.normal(kx, (N3, C3), dtype=jnp.float32))
    tg3 = (jax.random.uniform(kt, (N3, C3)) > 0.5).astype(jnp.float32)
    loss3 = jax.block_until_ready(
        weighted_bce_loss(sx3, tg3, 0.75, block_rows=8, parallel_chunks=2))
    ref3 = weighted_bce_loss_ref(sx3, tg3, 0.75)
    assert jnp.allclose(loss3, ref3, rtol=1e-5, atol=1e-6), (loss3, ref3)

    # TODO(synk): PosWeightIsDynamic / per-class `weight` / reduce=False /
    # size_average=False paths are simple elementwise extensions; only the
    # default forward (scalar pos_weight, weight=None, mean) is implemented.
    print("KERNEL_OK")
</pallas_src>

<mosaic_0001>
module attributes {stable_mosaic.version = 11 : i64} {
  func.func @_wbce_kernel(%arg0: i32, %arg1: i32, %arg2: memref<1xf32, #tpu.memory_space<smem>>, %arg3: memref<16x32xf32, #tpu.memory_space<vmem>>, %arg4: memref<16x32xf32, #tpu.memory_space<vmem>>, %arg5: memref<8x32xf32, #tpu.memory_space<vmem>>) attributes {dimension_semantics = [#tpu.dimension_semantics<parallel>, #tpu.dimension_semantics<arbitrary>], iteration_bounds = array<i64: 1, 1>, scalar_prefetch = 0 : i64, scratch_operands = 0 : i64, tpu.core_type = #tpu.core_type<tc>, window_params = [{transform_indices = @transform_0, window_bounds = array<i64: 1>}, {transform_indices = @transform_1, window_bounds = array<i64: 16, 32>}, {transform_indices = @transform_2, window_bounds = array<i64: 16, 32>}, {transform_indices = @transform_3, window_bounds = array<i64: 8, 32>}]} {
    %c0_i32 = arith.constant 0 : i32
    %0 = arith.cmpi eq, %arg1, %c0_i32 : i32
    %1 = arith.extui %0 : i1 to i32
    %c0_i32_0 = arith.constant 0 : i32
    %2 = arith.cmpi ne, %1, %c0_i32_0 : i32
    scf.if %2 {
      %cst_13 = arith.constant 0.000000e+00 : f32
      %31 = vector.broadcast %cst_13 : f32 to vector<8x32xf32>
      %c0_14 = arith.constant 0 : index
      %c0_15 = arith.constant 0 : index
      %32 = vector.load %arg5[%c0_14, %c0_15] : memref<8x32xf32, #tpu.memory_space<vmem>>, vector<8x32xf32>
      tpu.vector_store %arg5[%c0_14, %c0_15], %31 {strides = array<i32>} : memref<8x32xf32, #tpu.memory_space<vmem>>, vector<8x32xf32>,
    } else {
    }
    %c0 = arith.constant 0 : index
    %c0_1 = arith.constant 0 : index
    %3 = vector.load %arg3[%c0, %c0_1] : memref<16x32xf32, #tpu.memory_space<vmem>>, vector<16x32xf32>
    %c0_2 = arith.constant 0 : index
    %c0_3 = arith.constant 0 : index
    %4 = vector.load %arg4[%c0_2, %c0_3] : memref<16x32xf32, #tpu.memory_space<vmem>>, vector<16x32xf32>
    %cst = arith.constant 1.000000e-07 : f32
    %cst_4 = arith.constant 0.99999988 : f32
    %5 = vector.broadcast %cst : f32 to vector<16x32xf32>
    %6 = arith.maximumf %5, %3 : vector<16x32xf32>
    %7 = vector.broadcast %cst_4 : f32 to vector<16x32xf32>
    %8 = arith.minimumf %7, %6 : vector<16x32xf32>
    %c0_5 = arith.constant 0 : index
    %9 = memref.load %arg2[%c0_5] : memref<1xf32, #tpu.memory_space<smem>>
    %10 = math.log %8 : vector<16x32xf32>
    %cst_6 = arith.constant 1.000000e+00 : f32
    %11 = vector.broadcast %cst_6 : f32 to vector<16x32xf32>
    %12 = arith.subf %11, %8 : vector<16x32xf32>
    %13 = math.log %12 : vector<16x32xf32>
    %cst_7 = arith.constant 1.000000e+00 : f32
    %14 = vector.broadcast %cst_7 : f32 to vector<16x32xf32>
    %15 = arith.subf %4, %14 : vector<16x32xf32>
    %16 = arith.mulf %15, %13 : vector<16x32xf32>
    %17 = arith.mulf %4, %10 : vector<16x32xf32>
    %18 = vector.broadcast %9 : f32 to vector<16x32xf32>
    %19 = arith.mulf %18, %17 : vector<16x32xf32>
    %20 = arith.subf %16, %19 : vector<16x32xf32>
    %c1_i32 = arith.constant 1 : i32
    %21 = arith.muli %arg0, %c1_i32 : i32
    %22 = arith.addi %21, %arg1 : i32
    %c16_i32 = arith.constant 16 : i32
    %23 = arith.muli %22, %c16_i32 : i32
    %c16_i32_8 = arith.constant 16 : i32
    %24 = arith.subi %c16_i32_8, %23 : i32
    %c16_i32_9 = arith.constant 16 : i32
    %25 = arith.cmpi sge, %24, %c16_i32_9 : i32
    %26 = arith.extui %25 : i1 to i32
    %c0_i32_10 = arith.constant 0 : i32
    %27 = arith.cmpi ne, %26, %c0_i32_10 : i32
    scf.if %27 {
      %c0_13 = arith.constant 0 : index
      %c0_14 = arith.constant 0 : index
      %31 = vector.load %arg5[%c0_13, %c0_14] : memref<8x32xf32, #tpu.memory_space<vmem>>, vector<8x32xf32>
      %32 = vector.shape_cast %20 : vector<16x32xf32> to vector<2x8x32xf32>
      %cst_15 = arith.constant dense<0.000000e+00> : vector<8x32xf32>
      %33 = vector.multi_reduction <add>, %32, %cst_15 [0] : vector<2x8x32xf32> to vector<8x32xf32>
      %34 = arith.addf %31, %33 : vector<8x32xf32>
      %c0_16 = arith.constant 0 : index
      %c0_17 = arith.constant 0 : index
      %35 = vector.load %arg5[%c0_16, %c0_17] : memref<8x32xf32, #tpu.memory_space<vmem>>, vector<8x32xf32>
      tpu.vector_store %arg5[%c0_16, %c0_17], %34 {strides = array<i32>} : memref<8x32xf32, #tpu.memory_space<vmem>>, vector<8x32xf32>,
    } else {
    }
    %c16_i32_11 = arith.constant 16 : i32
    %28 = arith.cmpi slt, %24, %c16_i32_11 : i32
    %29 = arith.extui %28 : i1 to i32
    %c0_i32_12 = arith.constant 0 : i32
    %30 = arith.cmpi ne, %29, %c0_i32_12 : i32
    scf.if %30 {
      %31 = tpu.iota {dimensions = array<i32: 0>} : vector<16x32xi32>
      %32 = vector.broadcast %23 : i32 to vector<16x32xi32>
      %33 = arith.addi %32, %31 : vector<16x32xi32>
      %c16_i32_13 = arith.constant 16 : i32
      %34 = vector.broadcast %c16_i32_13 : i32 to vector<16x32xi32>
      %35 = arith.cmpi slt, %33, %34 : vector<16x32xi32>
      %cst_14 = arith.constant 0.000000e+00 : f32
      %36 = vector.broadcast %cst_14 : f32 to vector<16x32xf32>
      %37 = arith.select %35, %20, %36 : vector<16x32xi1>, vector<16x32xf32>
      %c0_15 = arith.constant 0 : index
      %c0_16 = arith.constant 0 : index
      %38 = vector.load %arg5[%c0_15, %c0_16] : memref<8x32xf32, #tpu.memory_space<vmem>>, vector<8x32xf32>
      %39 = vector.shape_cast %37 : vector<16x32xf32> to vector<2x8x32xf32>
      %cst_17 = arith.constant dense<0.000000e+00> : vector<8x32xf32>
      %40 = vector.multi_reduction <add>, %39, %cst_17 [0] : vector<2x8x32xf32> to vector<8x32xf32>
      %41 = arith.addf %38, %40 : vector<8x32xf32>
      %c0_18 = arith.constant 0 : index
      %c0_19 = arith.constant 0 : index
      %42 = vector.load %arg5[%c0_18, %c0_19] : memref<8x32xf32, #tpu.memory_space<vmem>>, vector<8x32xf32>
      tpu.vector_store %arg5[%c0_18, %c0_19], %41 {strides = array<i32>} : memref<8x32xf32, #tpu.memory_space<vmem>>, vector<8x32xf32>,
    } else {
    }
    return
  }
  func.func @transform_0(%arg0: i32, %arg1: i32) -> i32 {
    %c0_i32 = arith.constant 0 : i32
    %c0_i32_0 = arith.constant 0 : i32
    return %c0_i32 : i32
  }
  func.func @transform_1(%arg0: i32, %arg1: i32) -> (i32, i32) {
    %c1_i32 = arith.constant 1 : i32
    %0 = arith.muli %arg0, %c1_i32 : i32
    %1 = arith.addi %0, %arg1 : i32
    %c0_i32 = arith.constant 0 : i32
    %2 = arith.minsi %1, %c0_i32 : i32
    %c0_i32_0 = arith.constant 0 : i32
    %c0_i32_1 = arith.constant 0 : i32
    return %2, %c0_i32_0 : i32, i32
  }
  func.func @transform_2(%arg0: i32, %arg1: i32) -> (i32, i32) {
    %c1_i32 = arith.constant 1 : i32
    %0 = arith.muli %arg0, %c1_i32 : i32
    %1 = arith.addi %0, %arg1 : i32
    %c0_i32 = arith.constant 0 : i32
    %2 = arith.minsi %1, %c0_i32 : i32
    %c0_i32_0 = arith.constant 0 : i32
    %c0_i32_1 = arith.constant 0 : i32
    return %2, %c0_i32_0 : i32, i32
  }
  func.func @transform_3(%arg0: i32, %arg1: i32) -> (i32, i32) {
    %c0_i32 = arith.constant 0 : i32
    %c0_i32_0 = arith.constant 0 : i32
    return %arg0, %c0_i32 : i32, i32
  }
}

</mosaic_0001>

<llo_original>
// kernel: tpu_custom_call.1
$region0: #{tpu_custom_call.1}
  #allocation0 [shape = 'u32[]', space=smem, size = 0x4, offset = 0x4, fixed_abs, tag = 'smem constant byte address 0x4 - core index']
  #allocation1 [shape = 'u32[144,128]{1,0:T(1,128)}', space=vmem, size = 0x12000, scoped, tag = 'internal scratch']
  #allocation2 [shape = 'f32[1]{0:T(128)S(6)}', space=smem, size = 0x200, scoped, tag = 'scoped memory for tpu_custom_call.1']
  %s0 = inlined_call_operand.<no memory space> [shape: f32[1], index: 0, kind: input, shape index: {}]
  %s1 = inlined_call_operand.hbm [shape: f32[16,32], index: 1, kind: input, shape index: {}]
  %s2 = inlined_call_operand.hbm [shape: f32[16,32], index: 2, kind: input, shape index: {}]
  %s3 = inlined_call_operand.hbm [shape: f32[8,32], index: 3, kind: output, shape index: {}]
  %s4 = sld [smem:[#allocation0]]
  $region42: #{tpu_custom_call.1} parent=0
    _
  %s6 = ssub.s32 1, %s4
  %s7 = scalar_select 0, %s6, %s4
  %8 = sst [smem:[#allocation2]] %s0
  $region1: #{tpu_custom_call.1} parent=0
    #allocation3 [shape = 'u8[8192]{0}', space=vmem, size = 0x2000, scoped, tag = 'input window, operand 1, single buffered']
    #allocation4 [shape = 's32[1]{0}', space=sflag, size = 0x4, scoped, tag = 'scoped memory for tpu_custom_call.1']
    #allocation5 [shape = 's32[1]{0}', space=sflag, size = 0x4, scoped, tag = 'scoped memory for tpu_custom_call.1']
    #allocation6 [shape = 'u8[8192]{0}', space=vmem, size = 0x2000, scoped, tag = 'input window, operand 2, single buffered']
    #allocation7 [shape = 's32[1]{0}', space=sflag, size = 0x4, scoped, tag = 'scoped memory for tpu_custom_call.1']
    #allocation8 [shape = 'u8[4096]{0}', space=vmem, size = 0x1000, scoped, tag = 'output window, operand 0, single buffered']
    %9 = vsyncpa [#allocation4], 0
    %10 = vsyncpa [#allocation7], 0
    %11 = vsyncpa [#allocation5], 0
    // Predicated region
    $region2: #{tpu_custom_call.1} parent=1 // pred_check
      _
    $region3: #{tpu_custom_call.1} parent=1 // pred_check_branch
      %13 = sbr.rel (0) target = $region5
    $region4: #{tpu_custom_call.1} parent=1 // pred_region
      _
    $region5: #{tpu_custom_call.1} parent=1 // pred_fallthru
      _
    // Predicated region
    $region6: #{tpu_custom_call.1} parent=1 // pred_check
      _
    $region7: #{tpu_custom_call.1} parent=1 // pred_check_branch
      %15 = sbr.rel (0) target = $region9
    $region8: #{tpu_custom_call.1} parent=1 // pred_region
      %s16 = sadd.s32 0, 0
      %p17 = scmp.lt.s32.totalorder %s16, 0
      %s18 = scalar_select %p17, %s16, 0
      %s19 = smul.u32 2, %s18
      %s21 = ssub.s32 256, 256
      %22 = vsyncadd [#allocation4], %s21
      %s23 = smul.addr %s19, 128
      %s24 = scalar_lea.hbm %s1, %s23
      %s25 = sshll.u32 [#allocation3], 4
      %s26 = int_to_ptr.vmem [resolvable:$true] %s25
      %31 = dma.hbm_to_vmem [thread:$0]  %s24, 256, %s26, [#allocation4], 128, 128, 8
    $region9: #{tpu_custom_call.1} parent=1 // pred_fallthru
      _
    // Predicated region
    $region10: #{tpu_custom_call.1} parent=1 // pred_check
      _
    $region11: #{tpu_custom_call.1} parent=1 // pred_check_branch
      %33 = sbr.rel (0) target = $region13
    $region12: #{tpu_custom_call.1} parent=1 // pred_region
      %s34 = sadd.s32 0, 0
      %p35 = scmp.lt.s32.totalorder %s34, 0
      %s36 = scalar_select %p35, %s34, 0
      %s37 = smul.u32 2, %s36
      %s39 = ssub.s32 256, 256
      %40 = vsyncadd [#allocation7], %s39
      %s41 = smul.addr %s37, 128
      %s42 = scalar_lea.hbm %s2, %s41
      %s43 = sshll.u32 [#allocation6], 4
      %s44 = int_to_ptr.vmem [resolvable:$true] %s43
      %49 = dma.hbm_to_vmem [thread:$0]  %s42, 256, %s44, [#allocation7], 128, 128, 8
    $region13: #{tpu_custom_call.1} parent=1 // pred_fallthru
      _
    // Predicated region
    $region14: #{tpu_custom_call.1} parent=1 // pred_check
      _
    $region15: #{tpu_custom_call.1} parent=1 // pred_check_branch
      %51 = sbr.rel (0) target = $region17
    $region16: #{tpu_custom_call.1} parent=1 // pred_region
      %52 = dma.done [#allocation4], 256
    $region17: #{tpu_custom_call.1} parent=1 // pred_fallthru
      _
    // Predicated region
    $region18: #{tpu_custom_call.1} parent=1 // pred_check
      _
    $region19: #{tpu_custom_call.1} parent=1 // pred_check_branch
      %54 = sbr.rel (0) target = $region21
    $region20: #{tpu_custom_call.1} parent=1 // pred_region
      %55 = dma.done [#allocation7], 256
    $region21: #{tpu_custom_call.1} parent=1 // pred_fallthru
      _
    %s56 = sadd.s32 0, 0
    %p57 = scmp.lt.s32.totalorder %s56, 0
    %s58 = scalar_select %p57, %s56, 0
    %s59 = smul.u32 2, %s58
    %s60 = sadd.s32 0, 0
    %p61 = scmp.lt.s32.totalorder %s60, 0
    %s62 = scalar_select %p61, %s60, 0
    %s63 = smul.u32 2, %s62
    %p64 = scmp.eq.s32.totalorder 0, 0
    // Predicated region
    $region22: #{tpu_custom_call.1} parent=1 // pred_check
      %p65 = pneg %p64
    $region23: #{tpu_custom_call.1} parent=1 // pred_check_branch
      %67 = sbr.rel (%p65) target = $region25
    $region24: #{tpu_custom_call.1} parent=1 // pred_region
      %vm68 = vcmask 261120
      %69 = vst.msk [vmem:[#allocation8] sm:$0xff] %vm68, 0.0
    $region25: #{tpu_custom_call.1} parent=1 // pred_fallthru
      _
    %v70 = vld [vmem:[#allocation3] sm:$0xff]
    %v71 = vld [vmem:[#allocation3 + $0x8] sm:$0xff]
    %v72 = vld [vmem:[#allocation6] sm:$0xff]
    %v73 = vld [vmem:[#allocation6 + $0x8] sm:$0xff]
    %v74 = vmax.f32 %v70, 1e-07
    %v75 = vmax.f32 %v71, 1e-07
    %v76 = vmin.f32 %v74, 0.9999999
    %v77 = vmin.f32 %v75, 0.9999999
    %s78 = sld [smem:[#allocation2]]
    %v79 = vlog2.pop %v76
    %v80 = vmul.f32 %v79, 0.6931472
    %v81 = vlog2.pop %v77
    %v82 = vmul.f32 %v81, 0.6931472
    %v83 = vsub.f32 1.0, %v76
    %v84 = vsub.f32 1.0, %v77
    %v85 = vlog2.pop %v83
    %v86 = vmul.f32 %v85, 0.6931472
    %v87 = vlog2.pop %v84
    %v88 = vmul.f32 %v87, 0.6931472
    %v89 = vsub.f32 %v72, 1.0
    %v90 = vsub.f32 %v73, 1.0
    %v91 = vmul.f32 %v89, %v86
    %v92 = vmul.f32 %v90, %v88
    %v93 = vmul.f32 %v72, %v80
    %v94 = vmul.f32 %v73, %v82
    %v95 = vstv %s78
    %v96 = vmul.f32 %v95, %v93
    %v97 = vmul.f32 %v95, %v94
    %v98 = vsub.f32 %v91, %v96
    %v99 = vsub.f32 %v92, %v97
    %s100 = sadd.s32 0, 0
    %s101 = smul.u32 %s100, 16
    %s102 = ssub.s32 16, %s101
    %p103 = scmp.ge.s32.totalorder %s102, 16
    // Predicated region
    $region26: #{tpu_custom_call.1} parent=1 // pred_check
      %p104 = pneg %p103
    $region27: #{tpu_custom_call.1} parent=1 // pred_check_branch
      %106 = sbr.rel (%p104) target = $region29
    $region28: #{tpu_custom_call.1} parent=1 // pred_region
      %v107 = vld [vmem:[#allocation8] sm:$0xff]
      %vm108 = vcmask 261120
      %v109 = vsel %vm108, %v98, 0.0
      %v110 = vsel %vm108, %v99, 0.0
      %v111 = vadd.f32 %v109, %v110
      %v112 = vadd.f32 %v107, %v111
      %113 = vst.msk [vmem:[#allocation8] sm:$0xff] %vm108, %v112
    $region29: #{tpu_custom_call.1} parent=1 // pred_fallthru
      _
    %p114 = scmp.lt.s32.totalorder %s102, 16
    // Predicated region
    $region30: #{tpu_custom_call.1} parent=1 // pred_check
      %p115 = pneg %p114
    $region31: #{tpu_custom_call.1} parent=1 // pred_check_branch
      %117 = sbr.rel (%p115) target = $region33
    $region32: #{tpu_custom_call.1} parent=1 // pred_region
      %v118 = vlaneseq
      %v119 = vshrl.u32 %v118, 7
      %v120 = vadd.s32 %v119, 8
      %v121 = vstv %s101
      %v122 = vadd.s32 %v121, %v119
      %v123 = vadd.s32 %v121, %v120
      %vm124 = vcmp.lt.s32.totalorder %v122, 16
      %vm125 = vcmp.lt.s32.totalorder %v123, 16
      %v126 = vsel %vm124, %v98, 0.0
      %v127 = vsel %vm125, %v99, 0.0
      %v128 = vld [vmem:[#allocation8] sm:$0xff]
      %vm129 = vcmask 261120
      %v130 = vsel %vm129, %v126, 0.0
      %v131 = vsel %vm129, %v127, 0.0
      %v132 = vadd.f32 %v130, %v131
      %v133 = vadd.f32 %v128, %v132
      %134 = vst.msk [vmem:[#allocation8] sm:$0xff] %vm129, %v133
    $region33: #{tpu_custom_call.1} parent=1 // pred_fallthru
      _
    // Predicated region
    $region34: #{tpu_custom_call.1} parent=1 // pred_check
      _
    $region35: #{tpu_custom_call.1} parent=1 // pred_check_branch
      %136 = sbr.rel (0) target = $region37
    $region36: #{tpu_custom_call.1} parent=1 // pred_region
      %s138 = ssub.s32 128, 128
      %139 = vsyncadd [#allocation5], %s138
      %s141 = sshll.u32 [#allocation8], 4
      %s142 = int_to_ptr.vmem [resolvable:$true] %s141
      %144 = dma.vmem_to_hbm [thread:$0]  %s142, 128, %s3, [#allocation5]
    $region37: #{tpu_custom_call.1} parent=1 // pred_fallthru
      _
    // Predicated region
    $region38: #{tpu_custom_call.1} parent=1 // pred_check
      _
    $region39: #{tpu_custom_call.1} parent=1 // pred_check_branch
      %146 = sbr.rel (0) target = $region41
    $region40: #{tpu_custom_call.1} parent=1 // pred_region
      %147 = dma.done [#allocation5], 128
    $region41: #{tpu_custom_call.1} parent=1 // pred_fallthru
      _
    %148 = vsyncpa [#allocation4], 1
    %149 = vsyncpa [#allocation7], 1
    %150 = vsyncpa [#allocation5], 1

</llo_original>
